<compile_context>
chip_gen: v7x
topology: tpu7x:2x2x1
jax: 0.10.0
libtpu: 0.0.40
codegen_flags: <defaults>
</compile_context>

<pallas_src>
import jax
import jax.numpy as jnp
from jax.experimental import pallas as pl
from jax.experimental.pallas import tpu as pltpu


def _make_threshold_kernel(D: float):
    # pred = (2 - dist > D)  <=>  dist < 2 - D.
    # For D < 2 this equals d2 < (2-D)^2 (dist >= 0), which breaks the
    # compare's dependence on the sqrt.  For D >= 2 it is always False.
    thresh_sq = float((2.0 - D) ** 2) if D < 2.0 else None

    def kernel(x1_ref, x2_ref, w_ref, pred_ref, dist_ref):
        # x*_ref: [TB, H] f32; w_ref: [H, E] bf16 (VMEM-resident).
        diff = x1_ref[...] - x2_ref[...]                          # f32, VPU
        demb = jnp.dot(diff.astype(jnp.bfloat16), w_ref[...],
                       preferred_element_type=jnp.float32)        # [TB, E] f32 acc
        d2 = jnp.sum(demb * demb, axis=1, keepdims=True)          # [TB, 1] f32
        dist_ref[...] = jnp.sqrt(d2)                              # EUP
        if thresh_sq is None:
            pred_ref[...] = jnp.zeros(pred_ref.shape, pred_ref.dtype)
        else:
            pred_ref[...] = (d2 < thresh_sq).astype(jnp.int32)

    return kernel


def threshold_classifier(x1, x2, w, b, D: float, *, block_b: int = 512):
    """Fused Pallas forward.

    x1, x2: [B, H] f32;  w: [H, E];  b: [E] (unused — cancels in out1 - out2).
    Returns (pred: [B] int32, dist: [B] float32).
    """
    del b  # bias cancels in the difference of the two linear outputs
    B, H = x1.shape
    E = w.shape[1]

    # Batch tile: whole batch if small, else a large multiple-of-8 tile so the
    # per-step pipeline overhead is amortized.
    TB = B if B <= block_b else block_b
    grid = (pl.cdiv(B, TB),)

    # bf16 weight: MXU-native and halves the weight DMA / VMEM footprint.
    w_bf16 = w.astype(jnp.bfloat16)

    # VMEM budget: double-buffered x1/x2 tiles + resident bf16 W + tiny outputs.
    # TODO(synk): for very large H*E (weight block > ~24 MiB) add a K-grid axis
    # over H with a VMEM f32 accumulator instead of a resident W (v7x: 64 MiB).
    vmem_need = (2 * 2 * TB * H * 4) + (H * E * 2) + (2 * 2 * TB * 8)
    vmem_limit = int(min(max(4 * vmem_need, 16 << 20), 48 << 20))

    kernel = _make_threshold_kernel(D)
    pred, dist = pl.pallas_call(
        kernel,
        out_shape=(
            jax.ShapeDtypeStruct((B, 1), jnp.int32),
            jax.ShapeDtypeStruct((B, 1), jnp.float32),
        ),
        grid=grid,
        in_specs=[
            pl.BlockSpec((TB, H), lambda i: (i, 0)),
            pl.BlockSpec((TB, H), lambda i: (i, 0)),
            pl.BlockSpec((H, E), lambda i: (0, 0)),   # weight resident across steps
        ],
        out_specs=(
            # NOTE: lane-width-1 stores are fine at small B; for very large B a
            # lane-dense (grid, TB) output layout would cut masked-store cost.
            pl.BlockSpec((TB, 1), lambda i: (i, 0)),
            pl.BlockSpec((TB, 1), lambda i: (i, 0)),
        ),
        compiler_params=pltpu.CompilerParams(
            dimension_semantics=("parallel",),   # shard batch across TCs on v7x
            vmem_limit_bytes=vmem_limit,
        ),
    )(x1, x2, w_bf16)

    return pred[:, 0], dist[:, 0]


def threshold_classifier_ref(x1, x2, w, b, D: float):
    """Plain-JAX f32 reference mirroring the PyTorch semantics."""
    out1 = x1 @ w + b
    out2 = x2 @ w + b
    dist = jnp.linalg.norm(out1 - out2, axis=1)
    inv = 2.0 - dist
    return (inv > D).astype(jnp.int32), dist


if __name__ == "__main__":
    # Small shapes consistent with the module: batch=8, hidden=32, emb=128.
    B, H, E = 8, 32, 128

    key = jax.random.PRNGKey(0)
    k1, k2, kw, kb = jax.random.split(key, 4)
    x1 = jax.random.normal(k1, (B, H), dtype=jnp.float32)
    x2 = jax.random.normal(k2, (B, H), dtype=jnp.float32)
    # Deterministic synthetic parameters (no checkpoint load).
    w = jax.random.normal(kw, (H, E), dtype=jnp.float32) * 0.1
    b = jax.random.normal(kb, (E,), dtype=jnp.float32) * 0.1

    for D in (0.5, 3.0):   # exercise both the D<2 and D>=2 predicate paths
        pred, dist = threshold_classifier(x1, x2, w, b, D)
        pred = jax.block_until_ready(pred)
        dist = jax.block_until_ready(dist)

        pred_ref, dist_ref = threshold_classifier_ref(x1, x2, w, b, D)
        assert pred.shape == (B,) and dist.shape == (B,)
        # bf16 MXU inputs with f32 accumulation -> slightly looser tolerance.
        assert jnp.allclose(dist, dist_ref, atol=2e-2, rtol=2e-2)
        assert jnp.array_equal(pred, pred_ref)

    print("KERNEL_OK")
</pallas_src>

<mosaic_0001>
module attributes {stable_mosaic.version = 11 : i64} {
  func.func @kernel(%arg0: i32, %arg1: memref<8x32xf32, #tpu.memory_space<vmem>>, %arg2: memref<8x32xf32, #tpu.memory_space<vmem>>, %arg3: memref<32x128xbf16, #tpu.memory_space<vmem>>, %arg4: memref<8x1xi32, #tpu.memory_space<vmem>>, %arg5: memref<8x1xf32, #tpu.memory_space<vmem>>) attributes {dimension_semantics = [#tpu.dimension_semantics<parallel>], iteration_bounds = array<i64: 1>, scalar_prefetch = 0 : i64, scratch_operands = 0 : i64, tpu.core_type = #tpu.core_type<tc>, window_params = [{transform_indices = @transform_0, window_bounds = array<i64: 8, 32>}, {transform_indices = @transform_1, window_bounds = array<i64: 8, 32>}, {pipeline_mode = #tpu.pipeline_mode<synchronous>, transform_indices = @transform_2, window_bounds = array<i64: 32, 128>}, {transform_indices = @transform_3, window_bounds = array<i64: 8, 1>}, {transform_indices = @transform_4, window_bounds = array<i64: 8, 1>}]} {
    %c0 = arith.constant 0 : index
    %c0_0 = arith.constant 0 : index
    %0 = vector.load %arg1[%c0, %c0_0] : memref<8x32xf32, #tpu.memory_space<vmem>>, vector<8x32xf32>
    %c0_1 = arith.constant 0 : index
    %c0_2 = arith.constant 0 : index
    %1 = vector.load %arg2[%c0_1, %c0_2] : memref<8x32xf32, #tpu.memory_space<vmem>>, vector<8x32xf32>
    %2 = arith.subf %0, %1 : vector<8x32xf32>
    %3 = arith.truncf %2 : vector<8x32xf32> to vector<8x32xbf16>
    %c0_3 = arith.constant 0 : index
    %c0_4 = arith.constant 0 : index
    %4 = vector.load %arg3[%c0_3, %c0_4] : memref<32x128xbf16, #tpu.memory_space<vmem>>, vector<32x128xbf16>
    %cst = arith.constant dense<0.000000e+00> : vector<8x128xf32>
    %5 = tpu.matmul %3, %4, %cst {dimension_numbers = #tpu.dot_dimension_numbers<[1], [0], [0], [1], [0, 0, 1, 1], [], []>} : vector<8x32xbf16>, vector<32x128xbf16>, vector<8x128xf32> -> vector<8x128xf32>
    %6 = arith.mulf %5, %5 : vector<8x128xf32>
    %cst_5 = arith.constant dense<0.000000e+00> : vector<8xf32>
    %7 = vector.multi_reduction <add>, %6, %cst_5 [1] : vector<8x128xf32> to vector<8xf32>
    %8 = vector.shape_cast %7 : vector<8xf32> to vector<8x1xf32>
    %9 = math.sqrt %8 : vector<8x1xf32>
    %c0_6 = arith.constant 0 : index
    %c0_7 = arith.constant 0 : index
    %10 = vector.load %arg5[%c0_6, %c0_7] : memref<8x1xf32, #tpu.memory_space<vmem>>, vector<8x1xf32>
    tpu.vector_store %arg5[%c0_6, %c0_7], %9 {strides = array<i32>} : memref<8x1xf32, #tpu.memory_space<vmem>>, vector<8x1xf32>,
    %cst_8 = arith.constant 2.250000e+00 : f32
    %11 = vector.broadcast %cst_8 : f32 to vector<8x1xf32>
    %12 = arith.cmpf olt, %8, %11 : vector<8x1xf32>
    %13 = arith.extui %12 : vector<8x1xi1> to vector<8x1xi32>
    %c0_9 = arith.constant 0 : index
    %c0_10 = arith.constant 0 : index
    %14 = vector.load %arg4[%c0_9, %c0_10] : memref<8x1xi32, #tpu.memory_space<vmem>>, vector<8x1xi32>
    tpu.vector_store %arg4[%c0_9, %c0_10], %13 {strides = array<i32>} : memref<8x1xi32, #tpu.memory_space<vmem>>, vector<8x1xi32>,
    return
  }
  func.func @transform_0(%arg0: i32) -> (i32, i32) {
    %c0_i32 = arith.constant 0 : i32
    %c0_i32_0 = arith.constant 0 : i32
    return %arg0, %c0_i32 : i32, i32
  }
  func.func @transform_1(%arg0: i32) -> (i32, i32) {
    %c0_i32 = arith.constant 0 : i32
    %c0_i32_0 = arith.constant 0 : i32
    return %arg0, %c0_i32 : i32, i32
  }
  func.func @transform_2(%arg0: i32) -> (i32, i32) {
    %c0_i32 = arith.constant 0 : i32
    %c0_i32_0 = arith.constant 0 : i32
    %c0_i32_1 = arith.constant 0 : i32
    return %c0_i32, %c0_i32_0 : i32, i32
  }
  func.func @transform_3(%arg0: i32) -> (i32, i32) {
    %c0_i32 = arith.constant 0 : i32
    %c0_i32_0 = arith.constant 0 : i32
    return %arg0, %c0_i32 : i32, i32
  }
  func.func @transform_4(%arg0: i32) -> (i32, i32) {
    %c0_i32 = arith.constant 0 : i32
    %c0_i32_0 = arith.constant 0 : i32
    return %arg0, %c0_i32 : i32, i32
  }
}

</mosaic_0001>

<llo_original>
// kernel: tpu_custom_call.1
$region0: #{tpu_custom_call.1}
  #allocation0 [shape = 'u32[]', space=smem, size = 0x4, offset = 0x4, fixed_abs, tag = 'smem constant byte address 0x4 - core index']
  #allocation1 [shape = 'u32[144,128]{1,0:T(1,128)}', space=vmem, size = 0x12000, scoped, tag = 'internal scratch']
  %s0 = inlined_call_operand.hbm [shape: f32[8,32], index: 0, kind: input, shape index: {}]
  %s1 = inlined_call_operand.hbm [shape: f32[8,32], index: 1, kind: input, shape index: {}]
  %s2 = inlined_call_operand.hbm [shape: bf16[32,128], index: 2, kind: input, shape index: {}]
  %s3 = inlined_call_operand.vmem [shape: s32[8,1], index: 3, kind: output, shape index: {0}]
  %s4 = inlined_call_operand.vmem [shape: f32[8,1], index: 4, kind: output, shape index: {1}]
  %5 = xla_tuple %s3, %s4
  %s6 = sld [smem:[#allocation0]]
  $region42: #{tpu_custom_call.1} parent=0
    _
  %s8 = ssub.s32 1, %s6
  %s9 = scalar_select 0, %s8, %s6
  $region1: #{tpu_custom_call.1} parent=0
    #allocation2 [shape = 'u8[4096]{0}', space=vmem, size = 0x1000, scoped, tag = 'input window, operand 0, single buffered']
    #allocation3 [shape = 's32[1]{0}', space=sflag, size = 0x4, scoped, tag = 'scoped memory for tpu_custom_call.1']
    #allocation4 [shape = 'u8[4096]{0}', space=vmem, size = 0x1000, scoped, tag = 'input window, operand 1, single buffered']
    #allocation5 [shape = 's32[1]{0}', space=sflag, size = 0x4, scoped, tag = 'scoped memory for tpu_custom_call.1']
    #allocation6 [shape = 'u8[8192]{0}', space=vmem, size = 0x2000, scoped, tag = 'input window, operand 2, single buffered']
    %10 = vsyncpa [#allocation3], 0
    %11 = vsyncpa [#allocation5], 0
    // Predicated region
    $region2: #{tpu_custom_call.1} parent=1 // pred_check
      _
    $region3: #{tpu_custom_call.1} parent=1 // pred_check_branch
      %13 = sbr.rel (0) target = $region5
    $region4: #{tpu_custom_call.1} parent=1 // pred_region
      %s15 = ssub.s32 128, 128
      %16 = vsyncadd [#allocation3], %s15
      %s18 = sshll.u32 [#allocation2], 4
      %s19 = int_to_ptr.vmem [resolvable:$true] %s18
      %21 = dma.hbm_to_vmem [thread:$0]  %s0, 128, %s19, [#allocation3]
    $region5: #{tpu_custom_call.1} parent=1 // pred_fallthru
      _
    // Predicated region
    $region6: #{tpu_custom_call.1} parent=1 // pred_check
      _
    $region7: #{tpu_custom_call.1} parent=1 // pred_check_branch
      %23 = sbr.rel (0) target = $region9
    $region8: #{tpu_custom_call.1} parent=1 // pred_region
      %s25 = ssub.s32 128, 128
      %26 = vsyncadd [#allocation5], %s25
      %s28 = sshll.u32 [#allocation4], 4
      %s29 = int_to_ptr.vmem [resolvable:$true] %s28
      %31 = dma.hbm_to_vmem [thread:$0]  %s1, 128, %s29, [#allocation5]
    $region9: #{tpu_custom_call.1} parent=1 // pred_fallthru
      _
    // Predicated region
    $region10: #{tpu_custom_call.1} parent=1 // pred_check
      _
    $region11: #{tpu_custom_call.1} parent=1 // pred_check_branch
      %33 = sbr.rel (0) target = $region13
    $region12: #{tpu_custom_call.1} parent=1 // pred_region
      %s35 = ssub.s32 256, 256
      %36 = vsyncadd [#allocation5], %s35
      %s37 = sshll.u32 [#allocation6], 4
      %s38 = int_to_ptr.vmem [resolvable:$true] %s37
      %43 = dma.hbm_to_vmem [thread:$0]  %s2, 256, %s38, [#allocation5], 64, 64, 4
    $region13: #{tpu_custom_call.1} parent=1 // pred_fallthru
      _
    // Predicated region
    $region14: #{tpu_custom_call.1} parent=1 // pred_check
      _
    $region15: #{tpu_custom_call.1} parent=1 // pred_check_branch
      %45 = sbr.rel (0) target = $region17
    $region16: #{tpu_custom_call.1} parent=1 // pred_region
      %46 = dma.done [#allocation3], 128
    $region17: #{tpu_custom_call.1} parent=1 // pred_fallthru
      _
    // Predicated region
    $region18: #{tpu_custom_call.1} parent=1 // pred_check
      _
    $region19: #{tpu_custom_call.1} parent=1 // pred_check_branch
      %48 = sbr.rel (0) target = $region21
    $region20: #{tpu_custom_call.1} parent=1 // pred_region
      %49 = dma.done [#allocation5], 128
    $region21: #{tpu_custom_call.1} parent=1 // pred_fallthru
      _
    // Predicated region
    $region22: #{tpu_custom_call.1} parent=1 // pred_check
      _
    $region23: #{tpu_custom_call.1} parent=1 // pred_check_branch
      %51 = sbr.rel (0) target = $region25
    $region24: #{tpu_custom_call.1} parent=1 // pred_region
      %52 = dma.done [#allocation5], 256
    $region25: #{tpu_custom_call.1} parent=1 // pred_fallthru
      _
    %v54 = vld [vmem:[#allocation2] sm:$0xff]
    %v55 = vld [vmem:[#allocation4] sm:$0xff]
    %v56 = vsub.f32 %v54, %v55
    %v57 = vpack.c.bf16 %v56, %v56
    %v58 = vld [vmem:[#allocation6] sm:$0xf]
    %v59 = vld [vmem:[#allocation6 + $0x4] sm:$0xf]
    %v60 = vld [vmem:[#allocation6 + $0x8] sm:$0xf]
    %v61 = vld [vmem:[#allocation6 + $0xc] sm:$0xf]
    %v66 = vunpack.c.l.b16 %v58
    %v67 = vunpack.c.l.b16 %v59
    %v68 = vunpack.c.l.b16 %v60
    %v69 = vunpack.c.l.b16 %v61
    %v70 = vpack.c.b16 %v67, %v66
    %v71 = vpack.c.b16 %v69, %v68
    %vm74 = vcmask 261120
    %v76 = vsel %vm74, %v57, 0
    %78 = vmatprep.subr.bf16.mxu0 0
    %79 = vmatpush1.bf16.msra.mxu0 %v70
    %80 = vmatprep.subr.bf16.mxu0 0
    %81 = vmatpush1.bf16.msra.mxu0 %v71
    %82 = vmatprep.subr.bf16.mxu0 0
    %83 = vmatpush1.bf16.msra.mxu0 0
    %84 = vmatprep.subr.bf16.mxu0 0
    %85 = vmatpush1.bf16.msra.mxu0 0
    %86 = vmatprep.subr.bf16.mxu0 0
    %87 = vmatpush1.bf16.msra.mxu0 0
    %88 = vmatprep.subr.bf16.mxu0 0
    %89 = vmatpush1.bf16.msra.mxu0 0
    %90 = vmatprep.subr.bf16.mxu0 0
    %91 = vmatpush1.bf16.msra.mxu0 0
    %92 = vmatprep.subr.bf16.mxu0 0
    %93 = vmatpush1.bf16.msra.mxu0 0
    %94 = vmatprep.subr.bf16.mxu0 0
    %95 = vmatpush1.bf16.msra.mxu0 0
    %96 = vmatprep.subr.bf16.mxu0 0
    %97 = vmatpush1.bf16.msra.mxu0 0
    %98 = vmatprep.subr.bf16.mxu0 0
    %99 = vmatpush1.bf16.msra.mxu0 0
    %100 = vmatprep.subr.bf16.mxu0 0
    %101 = vmatpush1.bf16.msra.mxu0 0
    %102 = vmatprep.subr.bf16.mxu0 0
    %103 = vmatpush1.bf16.msra.mxu0 0
    %104 = vmatprep.subr.bf16.mxu0 0
    %105 = vmatpush1.bf16.msra.mxu0 0
    %106 = vmatprep.subr.bf16.mxu0 0
    %107 = vmatpush1.bf16.msra.mxu0 0
    %108 = vmatprep.subr.bf16.mxu0 0
    %109 = vmatpush1.bf16.msra.mxu0 0
    %110 = vmatprep.mubr.bf16.mxu0 0
    %111 = vmatmul.mubr.bf16.gmra.mrb[0].mxu0 %v76
    %v112 = vpop.f32.mrb[0].mxu0
    %v113 = vadd.f32 0.0, %v112
    %v114 = vpop.f32.mrb[0].mxu0
    %v115 = vpop.f32.mrb[0].mxu0
    %v116 = vpop.f32.mrb[0].mxu0
    %117 = vdwg.mxu0
    %v118 = vmul.f32 %v113, %v113
    %119 = vadd.xlane.f32.xlu0 %v118
    %v120 = vpop.xlane.xlu0 %119
    %v121 = vrsqrt.pop %v120
    %v122 = vmul.f32 %v120, %v121
    %vm123 = vcmp.eq.f32.partialorder %v120, inf
    %v124 = vsel %vm123, %v120, %v122
    %vm125 = vcmp.eq.f32.partialorder %v120, 0.0
    %v126 = vand.u32 %v120, 2147483648
    %v127 = vsel %vm125, %v126, %v124
    %vm128 = vcmask 7168
    %129 = vst.msk [vmem:[%s4] sm:$0xff] %vm128, %v127
    %vm130 = vcmp.lt.f32.partialorder %v120, 2.25
    %v131 = vsel %vm130, 1, 0
    %132 = vst.msk [vmem:[%s3] sm:$0xff] %vm128, %v131
    // Predicated region
    $region26: #{tpu_custom_call.1} parent=1 // pred_check
      _
    $region27: #{tpu_custom_call.1} parent=1 // pred_check_branch
      %134 = sbr.rel (0) target = $region29
    $region28: #{tpu_custom_call.1} parent=1 // pred_region
      _
    $region29: #{tpu_custom_call.1} parent=1 // pred_fallthru
      _
    // Predicated region
    $region30: #{tpu_custom_call.1} parent=1 // pred_check
      _
    $region31: #{tpu_custom_call.1} parent=1 // pred_check_branch
      %136 = sbr.rel (0) target = $region33
    $region32: #{tpu_custom_call.1} parent=1 // pred_region
      _
    $region33: #{tpu_custom_call.1} parent=1 // pred_fallthru
      _
    // Predicated region
    $region34: #{tpu_custom_call.1} parent=1 // pred_check
      _
    $region35: #{tpu_custom_call.1} parent=1 // pred_check_branch
      %138 = sbr.rel (0) target = $region37
    $region36: #{tpu_custom_call.1} parent=1 // pred_region
      _
    $region37: #{tpu_custom_call.1} parent=1 // pred_fallthru
      _
    // Predicated region
    $region38: #{tpu_custom_call.1} parent=1 // pred_check
      _
    $region39: #{tpu_custom_call.1} parent=1 // pred_check_branch
      %140 = sbr.rel (0) target = $region41
    $region40: #{tpu_custom_call.1} parent=1 // pred_region
      _
    $region41: #{tpu_custom_call.1} parent=1 // pred_fallthru
      _
    %141 = vsyncpa [#allocation3], 1
    %142 = vsyncpa [#allocation5], 1

</llo_original>
